<compile_context>
chip_gen: v5e
topology: v5e:2x2
jax: 0.10.0
libtpu: 0.0.40
codegen_flags: <defaults>
</compile_context>

<pallas_src>
import functools

import jax
import jax.numpy as jnp
from jax.experimental import pallas as pl
from jax.experimental.pallas import tpu as pltpu


def _round_up(x, m):
    return ((x + m - 1) // m) * m


def _qc_linear_kernel(j_sq_ref,                 # scalar prefetch (SMEM): j^2
                      x_ref,                    # (2, tm, tk) stacked [x_a ; x_b]
                      wa_ref, wb_ref,           # (tk, tn) weights, pre-transposed [K, N]
                      ba_ref, bb_ref,           # (1, tn) biases (f32)
                      oa_ref, ob_ref,           # (tm, tn) output tiles
                      acc_a_ref, acc_b_ref,     # (2*tm, tn) f32 accumulators
                      *, tm):
    k = pl.program_id(2)
    nk = pl.num_programs(2)

    @pl.when(k == 0)
    def _init():
        acc_a_ref[...] = jnp.zeros_like(acc_a_ref)
        acc_b_ref[...] = jnp.zeros_like(acc_b_ref)

    # Activation streams were stacked in the wrapper; merging the leading
    # (2, tm) dims into 2*tm rows is layout-free (no per-step copy / concat).
    x = x_ref[...].reshape(2 * tm, x_ref.shape[-1])

    # Weights arrive already as [K, N]: canonical (m,k)x(k,n) MXU contraction,
    # no per-step RHS transpose. f32 accumulation regardless of operand dtype.
    acc_a_ref[...] += jnp.dot(x, wa_ref[...], preferred_element_type=jnp.float32)
    acc_b_ref[...] += jnp.dot(x, wb_ref[...], preferred_element_type=jnp.float32)

    @pl.when(k == nk - 1)
    def _finalize():
        j_sq = j_sq_ref[0]
        # Slice the accumulator refs directly — only half a tile live at once.
        oa_ref[...] = (acc_a_ref[pl.ds(0, tm), :]          # x_a @ Wa^T
                       + j_sq * acc_b_ref[pl.ds(tm, tm), :]  # j^2 * (x_b @ Wb^T)
                       + ba_ref[...]).astype(oa_ref.dtype)
        ob_ref[...] = (acc_b_ref[pl.ds(0, tm), :]          # x_a @ Wb^T
                       + acc_a_ref[pl.ds(tm, tm), :]       # x_b @ Wa^T
                       + bb_ref[...]).astype(ob_ref.dtype)


def qc_matrix_linear(x_a, x_b, theta, weight_a, weight_b, bias_a, bias_b,
                     *, compute_dtype=jnp.bfloat16,
                     tm_max=256, tn_max=512, tk_max=512):
    """Pallas implementation of QCMatrixLinear.forward (scalar theta).

    x_a, x_b:            [batch, in_features]
    weight_a, weight_b:  [out_features, in_features]
    bias_a, bias_b:      [out_features]
    compute_dtype:       dtype of the MXU operands (bf16 default; f32 exact)
    returns (out_a, out_b), each [batch, out_features] in x_a.dtype
    """
    M, K = x_a.shape
    N, K2 = weight_a.shape
    assert K == K2, "in_features mismatch"
    out_dtype = x_a.dtype

    # Tile sizes: lane-dense tn (mult. of 128), sublane-aligned tm (mult. of 8),
    # tk multiple of 128. 2*tm rows is the fused-LHS height fed to the MXU.
    tm = max(8, min(tm_max, _round_up(M, 8)))
    tn = min(tn_max, _round_up(N, 128))
    tk = min(tk_max, _round_up(K, 128))

    # v7x megacore: if both "parallel" grid axes would have a single block and
    # N is big enough to split, halve tn so work shards across the 2 TCs.
    if (_round_up(M, tm) // tm) < 2 and (_round_up(N, tn) // tn) < 2:
        n128 = _round_up(N, 128)
        if n128 >= 256:
            tn = _round_up(n128 // 2, 128)

    m_pad = _round_up(M, tm)
    n_pad = _round_up(N, tn)
    k_pad = _round_up(K, tk)

    def pad2(a, rows, cols, dtype):
        return jnp.pad(a, ((0, rows - a.shape[0]),
                           (0, cols - a.shape[1]))).astype(dtype)

    # Stack both activation streams into one array -> single DMA stream,
    # no in-kernel concatenate.
    x_stacked = jnp.stack([pad2(x_a, m_pad, k_pad, compute_dtype),
                           pad2(x_b, m_pad, k_pad, compute_dtype)], axis=0)

    # One-time wrapper-side transpose to [K, N] (weights are static).
    wa_t = pad2(weight_a.T, k_pad, n_pad, compute_dtype)
    wb_t = pad2(weight_b.T, k_pad, n_pad, compute_dtype)

    ba_p = jnp.pad(bias_a.astype(jnp.float32), (0, n_pad - N)).reshape(1, n_pad)
    bb_p = jnp.pad(bias_b.astype(jnp.float32), (0, n_pad - N)).reshape(1, n_pad)

    # j^2 = -1 + sin(2*theta): once in the wrapper, scalar-prefetched to SMEM.
    j_sq = (-1.0 + jnp.sin(2.0 * jnp.asarray(theta, jnp.float32))).reshape((1,))

    grid = (m_pad // tm, n_pad // tn, k_pad // tk)

    # VMEM budget from actual tile footprint (double-buffered inputs/outputs,
    # resident f32 accumulators); keeps headroom on v7x's 64 MiB per-TC VMEM.
    in_size = jnp.dtype(compute_dtype).itemsize
    out_size = jnp.dtype(out_dtype).itemsize
    footprint = (2 * (2 * tm * tk * in_size)        # stacked activations
                 + 2 * 2 * (tk * tn * in_size)      # two weights
                 + 2 * 2 * (tn * 4)                 # two biases
                 + 2 * 2 * (tm * tn * out_size)     # two outputs
                 + 2 * (2 * tm * tn * 4))           # two f32 accumulators
    vmem_limit = int(max(2 * footprint, 16 * 1024 * 1024))

    cost = pl.CostEstimate(
        flops=8 * m_pad * n_pad * k_pad,
        transcendentals=0,
        bytes_accessed=(2 * m_pad * k_pad * in_size
                        + 2 * k_pad * n_pad * in_size
                        + 2 * m_pad * n_pad * out_size
                        + 2 * n_pad * 4),
    )

    kernel = functools.partial(_qc_linear_kernel, tm=tm)

    out_a_p, out_b_p = pl.pallas_call(
        kernel,
        out_shape=(
            jax.ShapeDtypeStruct((m_pad, n_pad), out_dtype),
            jax.ShapeDtypeStruct((m_pad, n_pad), out_dtype),
        ),
        grid_spec=pltpu.PrefetchScalarGridSpec(
            num_scalar_prefetch=1,
            grid=grid,
            in_specs=[
                pl.BlockSpec((2, tm, tk), lambda i, j, k, jsq: (0, i, k)),  # [x_a;x_b]
                pl.BlockSpec((tk, tn), lambda i, j, k, jsq: (k, j)),        # W_a^T
                pl.BlockSpec((tk, tn), lambda i, j, k, jsq: (k, j)),        # W_b^T
                pl.BlockSpec((1, tn), lambda i, j, k, jsq: (0, j)),         # bias_a
                pl.BlockSpec((1, tn), lambda i, j, k, jsq: (0, j)),         # bias_b
            ],
            out_specs=[
                pl.BlockSpec((tm, tn), lambda i, j, k, jsq: (i, j)),
                pl.BlockSpec((tm, tn), lambda i, j, k, jsq: (i, j)),
            ],
            scratch_shapes=[
                pltpu.VMEM((2 * tm, tn), jnp.float32),
                pltpu.VMEM((2 * tm, tn), jnp.float32),
            ],
        ),
        compiler_params=pltpu.CompilerParams(
            dimension_semantics=("parallel", "parallel", "arbitrary"),
            vmem_limit_bytes=vmem_limit,
        ),
        cost_estimate=cost,
    )(j_sq, x_stacked, wa_t, wb_t, ba_p, bb_p)

    return out_a_p[:M, :N], out_b_p[:M, :N]


# ----------------------------------------------------------------------------
# Reference + test harness
# ----------------------------------------------------------------------------

def _xavier_uniform(key, out_features, in_features, dtype=jnp.float32):
    bound = (6.0 / (in_features + out_features)) ** 0.5
    return jax.random.uniform(key, (out_features, in_features), dtype,
                              minval=-bound, maxval=bound)


def _reference(x_a, x_b, theta, weight_a, weight_b, bias_a, bias_b):
    j_sq = -1.0 + jnp.sin(2.0 * theta)
    out_a = x_a @ weight_a.T + bias_a + (x_b @ weight_b.T) * j_sq
    out_b = x_a @ weight_b.T + bias_b + x_b @ weight_a.T
    return out_a, out_b


def _run_case(key, batch, in_features, out_features, theta,
              atol, rtol, **kwargs):
    k_xa, k_xb, k_wa, k_wb = jax.random.split(key, 4)
    x_a = jax.random.normal(k_xa, (batch, in_features), jnp.float32)
    x_b = jax.random.normal(k_xb, (batch, in_features), jnp.float32)
    weight_a = _xavier_uniform(k_wa, out_features, in_features)
    weight_b = _xavier_uniform(k_wb, out_features, in_features)
    bias_a = jnp.zeros((out_features,), jnp.float32)
    bias_b = jnp.zeros((out_features,), jnp.float32)

    out_a, out_b = qc_matrix_linear(x_a, x_b, theta, weight_a, weight_b,
                                    bias_a, bias_b, **kwargs)
    jax.block_until_ready((out_a, out_b))

    ref_a, ref_b = _reference(x_a, x_b, theta, weight_a, weight_b,
                              bias_a, bias_b)
    assert jnp.allclose(out_a, ref_a, atol=atol, rtol=rtol), "out_a mismatch"
    assert jnp.allclose(out_b, ref_b, atol=atol, rtol=rtol), "out_b mismatch"


if __name__ == "__main__":
    key = jax.random.PRNGKey(0)
    k1, k2 = jax.random.split(key, 2)
    theta = jnp.float32(0.7)

    # 1) Small shape matching the module spec, exact f32 compute path
    #    (exercises padding + lane-dense output: N=32 padded to 128).
    _run_case(k1, batch=8, in_features=32, out_features=32, theta=theta,
              atol=1e-4, rtol=1e-4, compute_dtype=jnp.float32)

    # 2) Multi-tile grid + K accumulation path with the default bf16 MXU path
    #    (forced small tiles -> grid = (1, 3, 2)); tolerance loosened for bf16.
    _run_case(k2, batch=16, in_features=256, out_features=384, theta=theta,
              atol=5e-2, rtol=5e-2,
              tm_max=16, tn_max=128, tk_max=128)

    print("KERNEL_OK")
</pallas_src>

<mosaic_0001>
module attributes {stable_mosaic.version = 11 : i64} {
  func.func @_qc_linear_kernel(%arg0: i32, %arg1: i32, %arg2: i32, %arg3: memref<1xf32, #tpu.memory_space<smem>>, %arg4: memref<2x8x128xf32, #tpu.memory_space<vmem>>, %arg5: memref<128x128xf32, #tpu.memory_space<vmem>>, %arg6: memref<128x128xf32, #tpu.memory_space<vmem>>, %arg7: memref<1x128xf32, #tpu.memory_space<vmem>>, %arg8: memref<1x128xf32, #tpu.memory_space<vmem>>, %arg9: memref<8x128xf32, #tpu.memory_space<vmem>>, %arg10: memref<8x128xf32, #tpu.memory_space<vmem>>, %arg11: memref<16x128xf32, #tpu.memory_space<vmem>>, %arg12: memref<16x128xf32, #tpu.memory_space<vmem>>) attributes {dimension_semantics = [#tpu.dimension_semantics<parallel>, #tpu.dimension_semantics<parallel>, #tpu.dimension_semantics<arbitrary>], iteration_bounds = array<i64: 1, 1, 1>, scalar_prefetch = 1 : i64, scratch_operands = 2 : i64, tpu.core_type = #tpu.core_type<tc>, window_params = [{transform_indices = @transform_0, window_bounds = array<i64: 2, 8, 128>}, {transform_indices = @transform_1, window_bounds = array<i64: 128, 128>}, {transform_indices = @transform_2, window_bounds = array<i64: 128, 128>}, {transform_indices = @transform_3, window_bounds = array<i64: 1, 128>}, {transform_indices = @transform_4, window_bounds = array<i64: 1, 128>}, {transform_indices = @transform_5, window_bounds = array<i64: 8, 128>}, {transform_indices = @transform_6, window_bounds = array<i64: 8, 128>}]} {
    %c0_i32 = arith.constant 0 : i32
    %0 = arith.cmpi eq, %arg2, %c0_i32 : i32
    %1 = arith.extui %0 : i1 to i32
    %c0_i32_0 = arith.constant 0 : i32
    %2 = arith.cmpi ne, %1, %c0_i32_0 : i32
    scf.if %2 {
      %cst_18 = arith.constant 0.000000e+00 : f32
      %18 = vector.broadcast %cst_18 : f32 to vector<16x128xf32>
      %c0_19 = arith.constant 0 : index
      %c0_20 = arith.constant 0 : index
      %19 = vector.load %arg11[%c0_19, %c0_20] : memref<16x128xf32, #tpu.memory_space<vmem>>, vector<16x128xf32>
      tpu.vector_store %arg11[%c0_19, %c0_20], %18 {strides = array<i32>} : memref<16x128xf32, #tpu.memory_space<vmem>>, vector<16x128xf32>,
      %cst_21 = arith.constant 0.000000e+00 : f32
      %20 = vector.broadcast %cst_21 : f32 to vector<16x128xf32>
      %c0_22 = arith.constant 0 : index
      %c0_23 = arith.constant 0 : index
      %21 = vector.load %arg12[%c0_22, %c0_23] : memref<16x128xf32, #tpu.memory_space<vmem>>, vector<16x128xf32>
      tpu.vector_store %arg12[%c0_22, %c0_23], %20 {strides = array<i32>} : memref<16x128xf32, #tpu.memory_space<vmem>>, vector<16x128xf32>,
    } else {
    }
    %c0 = arith.constant 0 : index
    %c0_1 = arith.constant 0 : index
    %c0_2 = arith.constant 0 : index
    %3 = vector.load %arg4[%c0, %c0_1, %c0_2] : memref<2x8x128xf32, #tpu.memory_space<vmem>>, vector<2x8x128xf32>
    %4 = vector.shape_cast %3 : vector<2x8x128xf32> to vector<16x128xf32>
    %c0_3 = arith.constant 0 : index
    %c0_4 = arith.constant 0 : index
    %5 = vector.load %arg11[%c0_3, %c0_4] : memref<16x128xf32, #tpu.memory_space<vmem>>, vector<16x128xf32>
    %c0_5 = arith.constant 0 : index
    %c0_6 = arith.constant 0 : index
    %6 = vector.load %arg5[%c0_5, %c0_6] : memref<128x128xf32, #tpu.memory_space<vmem>>, vector<128x128xf32>
    %cst = arith.constant dense<0.000000e+00> : vector<16x128xf32>
    %7 = tpu.matmul %4, %6, %cst {dimension_numbers = #tpu.dot_dimension_numbers<[1], [0], [0], [1], [0, 0, 1, 1], [], []>} : vector<16x128xf32>, vector<128x128xf32>, vector<16x128xf32> -> vector<16x128xf32>
    %8 = arith.addf %5, %7 : vector<16x128xf32>
    %c0_7 = arith.constant 0 : index
    %c0_8 = arith.constant 0 : index
    %9 = vector.load %arg11[%c0_7, %c0_8] : memref<16x128xf32, #tpu.memory_space<vmem>>, vector<16x128xf32>
    tpu.vector_store %arg11[%c0_7, %c0_8], %8 {strides = array<i32>} : memref<16x128xf32, #tpu.memory_space<vmem>>, vector<16x128xf32>,
    %c0_9 = arith.constant 0 : index
    %c0_10 = arith.constant 0 : index
    %10 = vector.load %arg12[%c0_9, %c0_10] : memref<16x128xf32, #tpu.memory_space<vmem>>, vector<16x128xf32>
    %c0_11 = arith.constant 0 : index
    %c0_12 = arith.constant 0 : index
    %11 = vector.load %arg6[%c0_11, %c0_12] : memref<128x128xf32, #tpu.memory_space<vmem>>, vector<128x128xf32>
    %cst_13 = arith.constant dense<0.000000e+00> : vector<16x128xf32>
    %12 = tpu.matmul %4, %11, %cst_13 {dimension_numbers = #tpu.dot_dimension_numbers<[1], [0], [0], [1], [0, 0, 1, 1], [], []>} : vector<16x128xf32>, vector<128x128xf32>, vector<16x128xf32> -> vector<16x128xf32>
    %13 = arith.addf %10, %12 : vector<16x128xf32>
    %c0_14 = arith.constant 0 : index
    %c0_15 = arith.constant 0 : index
    %14 = vector.load %arg12[%c0_14, %c0_15] : memref<16x128xf32, #tpu.memory_space<vmem>>, vector<16x128xf32>
    tpu.vector_store %arg12[%c0_14, %c0_15], %13 {strides = array<i32>} : memref<16x128xf32, #tpu.memory_space<vmem>>, vector<16x128xf32>,
    %c0_i32_16 = arith.constant 0 : i32
    %15 = arith.cmpi eq, %arg2, %c0_i32_16 : i32
    %16 = arith.extui %15 : i1 to i32
    %c0_i32_17 = arith.constant 0 : i32
    %17 = arith.cmpi ne, %16, %c0_i32_17 : i32
    scf.if %17 {
      %c0_18 = arith.constant 0 : index
      %18 = memref.load %arg3[%c0_18] : memref<1xf32, #tpu.memory_space<smem>>
      %c0_19 = arith.constant 0 : index
      %c0_20 = arith.constant 0 : index
      %19 = vector.load %arg11[%c0_19, %c0_20] : memref<16x128xf32, #tpu.memory_space<vmem>>, vector<8x128xf32>
      %c8 = arith.constant 8 : index
      %c0_21 = arith.constant 0 : index
      %20 = vector.load %arg12[%c8, %c0_21] : memref<16x128xf32, #tpu.memory_space<vmem>>, vector<8x128xf32>
      %21 = vector.broadcast %18 : f32 to vector<8x128xf32>
      %22 = arith.mulf %21, %20 : vector<8x128xf32>
      %23 = arith.addf %19, %22 : vector<8x128xf32>
      %c0_22 = arith.constant 0 : index
      %c0_23 = arith.constant 0 : index
      %24 = vector.load %arg7[%c0_22, %c0_23] : memref<1x128xf32, #tpu.memory_space<vmem>>, vector<1x128xf32>
      %25 = vector.broadcast %24 : vector<1x128xf32> to vector<8x128xf32>
      %26 = arith.addf %23, %25 : vector<8x128xf32>
      %c0_24 = arith.constant 0 : index
      %c0_25 = arith.constant 0 : index
      %27 = vector.load %arg9[%c0_24, %c0_25] : memref<8x128xf32, #tpu.memory_space<vmem>>, vector<8x128xf32>
      tpu.vector_store %arg9[%c0_24, %c0_25], %26 {strides = array<i32>} : memref<8x128xf32, #tpu.memory_space<vmem>>, vector<8x128xf32>,
      %c0_26 = arith.constant 0 : index
      %c0_27 = arith.constant 0 : index
      %28 = vector.load %arg12[%c0_26, %c0_27] : memref<16x128xf32, #tpu.memory_space<vmem>>, vector<8x128xf32>
      %c8_28 = arith.constant 8 : index
      %c0_29 = arith.constant 0 : index
      %29 = vector.load %arg11[%c8_28, %c0_29] : memref<16x128xf32, #tpu.memory_space<vmem>>, vector<8x128xf32>
      %30 = arith.addf %28, %29 : vector<8x128xf32>
      %c0_30 = arith.constant 0 : index
      %c0_31 = arith.constant 0 : index
      %31 = vector.load %arg8[%c0_30, %c0_31] : memref<1x128xf32, #tpu.memory_space<vmem>>, vector<1x128xf32>
      %32 = vector.broadcast %31 : vector<1x128xf32> to vector<8x128xf32>
      %33 = arith.addf %30, %32 : vector<8x128xf32>
      %c0_32 = arith.constant 0 : index
      %c0_33 = arith.constant 0 : index
      %34 = vector.load %arg10[%c0_32, %c0_33] : memref<8x128xf32, #tpu.memory_space<vmem>>, vector<8x128xf32>
      tpu.vector_store %arg10[%c0_32, %c0_33], %33 {strides = array<i32>} : memref<8x128xf32, #tpu.memory_space<vmem>>, vector<8x128xf32>,
    } else {
    }
    return
  }
  func.func @transform_0(%arg0: i32, %arg1: i32, %arg2: i32, %arg3: memref<1xf32, #tpu.memory_space<smem>>) -> (i32, i32, i32) {
    %c0_i32 = arith.constant 0 : i32
    %c0_i32_0 = arith.constant 0 : i32
    return %c0_i32, %arg0, %arg2 : i32, i32, i32
  }
  func.func @transform_1(%arg0: i32, %arg1: i32, %arg2: i32, %arg3: memref<1xf32, #tpu.memory_space<smem>>) -> (i32, i32) {
    %c0_i32 = arith.constant 0 : i32
    return %arg2, %arg1 : i32, i32
  }
  func.func @transform_2(%arg0: i32, %arg1: i32, %arg2: i32, %arg3: memref<1xf32, #tpu.memory_space<smem>>) -> (i32, i32) {
    %c0_i32 = arith.constant 0 : i32
    return %arg2, %arg1 : i32, i32
  }
  func.func @transform_3(%arg0: i32, %arg1: i32, %arg2: i32, %arg3: memref<1xf32, #tpu.memory_space<smem>>) -> (i32, i32) {
    %c0_i32 = arith.constant 0 : i32
    %c0_i32_0 = arith.constant 0 : i32
    return %c0_i32, %arg1 : i32, i32
  }
  func.func @transform_4(%arg0: i32, %arg1: i32, %arg2: i32, %arg3: memref<1xf32, #tpu.memory_space<smem>>) -> (i32, i32) {
    %c0_i32 = arith.constant 0 : i32
    %c0_i32_0 = arith.constant 0 : i32
    return %c0_i32, %arg1 : i32, i32
  }
  func.func @transform_5(%arg0: i32, %arg1: i32, %arg2: i32, %arg3: memref<1xf32, #tpu.memory_space<smem>>) -> (i32, i32) {
    %c0_i32 = arith.constant 0 : i32
    return %arg0, %arg1 : i32, i32
  }
  func.func @transform_6(%arg0: i32, %arg1: i32, %arg2: i32, %arg3: memref<1xf32, #tpu.memory_space<smem>>) -> (i32, i32) {
    %c0_i32 = arith.constant 0 : i32
    return %arg0, %arg1 : i32, i32
  }
}

</mosaic_0001>

<llo_original>
// kernel: tpu_custom_call.1
$region0: #{tpu_custom_call.1}
  #allocation0 [shape = 'u32[]', space=smem, size = 0x4, offset = 0x4, fixed_abs, tag = 'smem constant byte address 0x4 - core index']
  #allocation1 [shape = 'u32[72,128]{1,0:T(1,128)}', space=vmem, size = 0x9000, scoped, tag = 'internal scratch']
  #allocation2 [shape = 'f32[16,128]{1,0:T(8,128)}', space=vmem, size = 0x2000, scoped, tag = 'scratch operand']
  #allocation3 [shape = 'f32[16,128]{1,0:T(8,128)}', space=vmem, size = 0x2000, scoped, tag = 'scratch operand']
  #allocation4 [shape = 's32[1]{0}', space=sflag, size = 0x4, scoped, tag = 'scoped memory for tpu_custom_call.1']
  #allocation5 [shape = 'f32[1]{0:T(128)S(6)}', space=smem, size = 0x200, scoped, tag = 'prefetched SMEM operand 0']
  %s0 = inlined_call_operand.<no memory space> [shape: f32[1], index: 0, kind: input, shape index: {}]
  %s1 = inlined_call_operand.hbm [shape: f32[2,8,128], index: 1, kind: input, shape index: {}]
  %s2 = inlined_call_operand.hbm [shape: f32[128,128], index: 2, kind: input, shape index: {}]
  %s3 = inlined_call_operand.hbm [shape: f32[128,128], index: 3, kind: input, shape index: {}]
  %s4 = inlined_call_operand.vmem [shape: f32[1,128], index: 4, kind: input, shape index: {}]
  %s5 = inlined_call_operand.vmem [shape: f32[1,128], index: 5, kind: input, shape index: {}]
  %s6 = inlined_call_operand.hbm [shape: f32[8,128], index: 6, kind: output, shape index: {0}]
  %s7 = inlined_call_operand.hbm [shape: f32[8,128], index: 7, kind: output, shape index: {1}]
  %8 = xla_tuple %s6, %s7
  %s9 = sld [smem:[#allocation0]]
  $region58: #{tpu_custom_call.1} parent=0
    _
  %s11 = ssub.s32 1, %s9
  %s12 = scalar_select 0, %s11, %s9
  %13 = sst [smem:[#allocation5]] %s0
  $region1: #{tpu_custom_call.1} parent=0
    #allocation6 [shape = 'u8[8192]{0}', space=vmem, size = 0x2000, scoped, tag = 'input window, operand 1, single buffered']
    #allocation7 [shape = 's32[1]{0}', space=sflag, size = 0x4, scoped, tag = 'scoped memory for tpu_custom_call.1']
    #allocation8 [shape = 's32[1]{0}', space=sflag, size = 0x4, scoped, tag = 'scoped memory for tpu_custom_call.1']
    #allocation9 [shape = 'u8[65536]{0}', space=vmem, size = 0x10000, scoped, tag = 'input window, operand 2, single buffered']
    #allocation10 [shape = 's32[1]{0}', space=sflag, size = 0x4, scoped, tag = 'scoped memory for tpu_custom_call.1']
    #allocation11 [shape = 'u8[65536]{0}', space=vmem, size = 0x10000, scoped, tag = 'input window, operand 3, single buffered']
    #allocation12 [shape = 'u8[4096]{0}', space=vmem, size = 0x1000, scoped, tag = 'output window, operand 0, single buffered']
    #allocation13 [shape = 'u8[4096]{0}', space=vmem, size = 0x1000, scoped, tag = 'output window, operand 1, single buffered']
    #allocation14 [shape = 's32[1]{0}', space=sflag, size = 0x4, scoped, tag = 'scoped memory for tpu_custom_call.1']
    %14 = vsyncpa [#allocation7], 0
    %15 = vsyncpa [#allocation10], 0
    %16 = vsyncpa [#allocation8], 0
    %17 = vsyncpa [#allocation14], 0
    // Predicated region
    $region2: #{tpu_custom_call.1} parent=1 // pred_check
      _
    $region3: #{tpu_custom_call.1} parent=1 // pred_check_branch
      %19 = sbr.rel (0) target = $region5
    $region4: #{tpu_custom_call.1} parent=1 // pred_region
      %21 = vsyncadd [#allocation7], 0
      %s22 = sshll.u32 %s1, 4
      %s23 = int_to_ptr.hbm [resolvable:$true] %s22
      %s24 = sshll.u32 [#allocation6], 4
      %s25 = int_to_ptr.vmem [resolvable:$true] %s24
      %30 = dma.hbm_to_vmem [thread:$0]  %s23, 256, %s25, [#allocation7], 128, 128, 8
    $region5: #{tpu_custom_call.1} parent=1 // pred_fallthru
      _
    // Predicated region
    $region6: #{tpu_custom_call.1} parent=1 // pred_check
      _
    $region7: #{tpu_custom_call.1} parent=1 // pred_check_branch
      %32 = sbr.rel (0) target = $region9
    $region8: #{tpu_custom_call.1} parent=1 // pred_region
      %34 = vsyncadd [#allocation10], 0
      %s35 = sshll.u32 %s2, 4
      %s36 = int_to_ptr.hbm [resolvable:$true] %s35
      %s37 = sshll.u32 [#allocation9], 4
      %s38 = int_to_ptr.vmem [resolvable:$true] %s37
      %43 = dma.hbm_to_vmem [thread:$0]  %s36, 2048, %s38, [#allocation10], 128, 128, 8
    $region9: #{tpu_custom_call.1} parent=1 // pred_fallthru
      _
    // Predicated region
    $region10: #{tpu_custom_call.1} parent=1 // pred_check
      _
    $region11: #{tpu_custom_call.1} parent=1 // pred_check_branch
      %45 = sbr.rel (0) target = $region13
    $region12: #{tpu_custom_call.1} parent=1 // pred_region
      %47 = vsyncadd [#allocation10], 0
      %s48 = sshll.u32 %s3, 4
      %s49 = int_to_ptr.hbm [resolvable:$true] %s48
      %s50 = sshll.u32 [#allocation11], 4
      %s51 = int_to_ptr.vmem [resolvable:$true] %s50
      %56 = dma.hbm_to_vmem [thread:$0]  %s49, 2048, %s51, [#allocation10], 128, 128, 8
    $region13: #{tpu_custom_call.1} parent=1 // pred_fallthru
      _
    // Predicated region
    $region14: #{tpu_custom_call.1} parent=1 // pred_check
      _
    $region15: #{tpu_custom_call.1} parent=1 // pred_check_branch
      %58 = sbr.rel (0) target = $region17
    $region16: #{tpu_custom_call.1} parent=1 // pred_region
      _
    $region17: #{tpu_custom_call.1} parent=1 // pred_fallthru
      _
    // Predicated region
    $region18: #{tpu_custom_call.1} parent=1 // pred_check
      _
    $region19: #{tpu_custom_call.1} parent=1 // pred_check_branch
      %60 = sbr.rel (0) target = $region21
    $region20: #{tpu_custom_call.1} parent=1 // pred_region
      _
    $region21: #{tpu_custom_call.1} parent=1 // pred_fallthru
      _
    // Predicated region
    $region22: #{tpu_custom_call.1} parent=1 // pred_check
      _
    $region23: #{tpu_custom_call.1} parent=1 // pred_check_branch
      %62 = sbr.rel (0) target = $region25
    $region24: #{tpu_custom_call.1} parent=1 // pred_region
      %64 = dma.done [#allocation7], 256
    $region25: #{tpu_custom_call.1} parent=1 // pred_fallthru
      _
    // Predicated region
    $region26: #{tpu_custom_call.1} parent=1 // pred_check
      _
    $region27: #{tpu_custom_call.1} parent=1 // pred_check_branch
      %66 = sbr.rel (0) target = $region29
    $region28: #{tpu_custom_call.1} parent=1 // pred_region
      %68 = dma.done [#allocation10], 2048
    $region29: #{tpu_custom_call.1} parent=1 // pred_fallthru
      _
    // Predicated region
    $region30: #{tpu_custom_call.1} parent=1 // pred_check
      _
    $region31: #{tpu_custom_call.1} parent=1 // pred_check_branch
      %70 = sbr.rel (0) target = $region33
    $region32: #{tpu_custom_call.1} parent=1 // pred_region
      %72 = dma.done [#allocation10], 2048
    $region33: #{tpu_custom_call.1} parent=1 // pred_fallthru
      _
    %p73 = scmp.eq.s32.totalorder 0, 0
    // Predicated region
    $region34: #{tpu_custom_call.1} parent=1 // pred_check
      %p74 = pneg %p73
    $region35: #{tpu_custom_call.1} parent=1 // pred_check_branch
      %76 = sbr.rel (%p74) target = $region37
    $region36: #{tpu_custom_call.1} parent=1 // pred_region
      %77 = vst [vmem:[#allocation2] sm:$0xff] 0.0
      %78 = vst [vmem:[#allocation2 + $0x8] sm:$0xff] 0.0
      %79 = vst [vmem:[#allocation3] sm:$0xff] 0.0
      %80 = vst [vmem:[#allocation3 + $0x8] sm:$0xff] 0.0
    $region37: #{tpu_custom_call.1} parent=1 // pred_fallthru
      _
    %v81 = vld [vmem:[#allocation6] sm:$0xff]
    %v82 = vld [vmem:[#allocation6 + $0x8] sm:$0xff]
    %v83 = vld [vmem:[#allocation2] sm:$0xff]
    %v84 = vld [vmem:[#allocation2 + $0x8] sm:$0xff]
    %v85 = vld [vmem:[#allocation9] sm:$0xff]
    %v86 = vld [vmem:[#allocation9 + $0x8] sm:$0xff]
    %v87 = vld [vmem:[#allocation9 + $0x10] sm:$0xff]
    %v88 = vld [vmem:[#allocation9 + $0x18] sm:$0xff]
    %v89 = vld [vmem:[#allocation9 + $0x20] sm:$0xff]
    %v90 = vld [vmem:[#allocation9 + $0x28] sm:$0xff]
    %v91 = vld [vmem:[#allocation9 + $0x30] sm:$0xff]
    %v92 = vld [vmem:[#allocation9 + $0x38] sm:$0xff]
    %v93 = vld [vmem:[#allocation9 + $0x40] sm:$0xff]
    %v94 = vld [vmem:[#allocation9 + $0x48] sm:$0xff]
    %v95 = vld [vmem:[#allocation9 + $0x50] sm:$0xff]
    %v96 = vld [vmem:[#allocation9 + $0x58] sm:$0xff]
    %v97 = vld [vmem:[#allocation9 + $0x60] sm:$0xff]
    %v98 = vld [vmem:[#allocation9 + $0x68] sm:$0xff]
    %v99 = vld [vmem:[#allocation9 + $0x70] sm:$0xff]
    %v100 = vld [vmem:[#allocation9 + $0x78] sm:$0xff]
    %101 = vmatpush.msra.mxu0 %v100
    %102 = vmatpush.msra.mxu0 %v99
    %103 = vmatpush.msra.mxu0 %v98
    %104 = vmatpush.msra.mxu0 %v97
    %105 = vmatpush.msra.mxu0 %v96
    %106 = vmatpush.msra.mxu0 %v95
    %107 = vmatpush.msra.mxu0 %v94
    %108 = vmatpush.msra.mxu0 %v93
    %109 = vmatpush.msra.mxu0 %v92
    %110 = vmatpush.msra.mxu0 %v91
    %111 = vmatpush.msra.mxu0 %v90
    %112 = vmatpush.msra.mxu0 %v89
    %113 = vmatpush.msra.mxu0 %v88
    %114 = vmatpush.msra.mxu0 %v87
    %115 = vmatpush.msra.mxu0 %v86
    %116 = vmatpush.msra.mxu0 %v85
    %117 = vmatmul.f32.gmra.mxu0 %v81
    %v118 = vpop.f32.mrf.mxu0
    %v119 = vadd.f32 0.0, %v118
    %120 = vmatmul.f32.gmra.mxu0 %v82
    %v121 = vpop.f32.mrf.mxu0
    %v122 = vadd.f32 0.0, %v121
    %123 = vdwg.mxu0
    %v124 = vadd.f32 %v83, %v119
    %v125 = vadd.f32 %v84, %v122
    %126 = vst [vmem:[#allocation2] sm:$0xff] %v124
    %127 = vst [vmem:[#allocation2 + $0x8] sm:$0xff] %v125
    %v128 = vld [vmem:[#allocation3] sm:$0xff]
    %v129 = vld [vmem:[#allocation3 + $0x8] sm:$0xff]
    %v130 = vld [vmem:[#allocation11] sm:$0xff]
    %v131 = vld [vmem:[#allocation11 + $0x8] sm:$0xff]
    %v132 = vld [vmem:[#allocation11 + $0x10] sm:$0xff]
    %v133 = vld [vmem:[#allocation11 + $0x18] sm:$0xff]
    %v134 = vld [vmem:[#allocation11 + $0x20] sm:$0xff]
    %v135 = vld [vmem:[#allocation11 + $0x28] sm:$0xff]
    %v136 = vld [vmem:[#allocation11 + $0x30] sm:$0xff]
    %v137 = vld [vmem:[#allocation11 + $0x38] sm:$0xff]
    %v138 = vld [vmem:[#allocation11 + $0x40] sm:$0xff]
    %v139 = vld [vmem:[#allocation11 + $0x48] sm:$0xff]
    %v140 = vld [vmem:[#allocation11 + $0x50] sm:$0xff]
    %v141 = vld [vmem:[#allocation11 + $0x58] sm:$0xff]
    %v142 = vld [vmem:[#allocation11 + $0x60] sm:$0xff]
    %v143 = vld [vmem:[#allocation11 + $0x68] sm:$0xff]
    %v144 = vld [vmem:[#allocation11 + $0x70] sm:$0xff]
    %v145 = vld [vmem:[#allocation11 + $0x78] sm:$0xff]
    %146 = vmatpush.msra.mxu0 %v145
    %147 = vmatpush.msra.mxu0 %v144
    %148 = vmatpush.msra.mxu0 %v143
    %149 = vmatpush.msra.mxu0 %v142
    %150 = vmatpush.msra.mxu0 %v141
    %151 = vmatpush.msra.mxu0 %v140
    %152 = vmatpush.msra.mxu0 %v139
    %153 = vmatpush.msra.mxu0 %v138
    %154 = vmatpush.msra.mxu0 %v137
    %155 = vmatpush.msra.mxu0 %v136
    %156 = vmatpush.msra.mxu0 %v135
    %157 = vmatpush.msra.mxu0 %v134
    %158 = vmatpush.msra.mxu0 %v133
    %159 = vmatpush.msra.mxu0 %v132
    %160 = vmatpush.msra.mxu0 %v131
    %161 = vmatpush.msra.mxu0 %v130
    %162 = vmatmul.f32.gmra.mxu0 %v81
    %v163 = vpop.f32.mrf.mxu0
    %v164 = vadd.f32 0.0, %v163
    %165 = vmatmul.f32.gmra.mxu0 %v82
    %v166 = vpop.f32.mrf.mxu0
    %v167 = vadd.f32 0.0, %v166
    %168 = vdwg.mxu0
    %v169 = vadd.f32 %v128, %v164
    %v170 = vadd.f32 %v129, %v167
    %171 = vst [vmem:[#allocation3] sm:$0xff] %v169
    %172 = vst [vmem:[#allocation3 + $0x8] sm:$0xff] %v170
    // Predicated region
    $region38: #{tpu_custom_call.1} parent=1 // pred_check
      %p173 = pneg %p73
    $region39: #{tpu_custom_call.1} parent=1 // pred_check_branch
      %175 = sbr.rel (%p173) target = $region41
    $region40: #{tpu_custom_call.1} parent=1 // pred_region
      %s176 = sld [smem:[#allocation5]]
      %v177 = vld [vmem:[#allocation2] sm:$0xff]
      %v178 = vld [vmem:[#allocation3 + $0x8] sm:$0xff]
      %v179 = vstv %s176
      %v180 = vmul.f32 %v179, %v178
      %v181 = vadd.f32 %v177, %v180
      %v182 = vld [vmem:[%s4] sm:$0x1]
      %v184 = vperm.slane %v182, 0
      %v186 = vadd.f32 %v181, %v184
      %187 = vst [vmem:[#allocation12] sm:$0xff] %v186
      %v188 = vld [vmem:[#allocation3] sm:$0xff]
      %v189 = vld [vmem:[#allocation2 + $0x8] sm:$0xff]
      %v190 = vadd.f32 %v188, %v189
      %v191 = vld [vmem:[%s5] sm:$0x1]
      %v193 = vperm.slane %v191, 0
      %v195 = vadd.f32 %v190, %v193
      %196 = vst [vmem:[#allocation13] sm:$0xff] %v195
    $region41: #{tpu_custom_call.1} parent=1 // pred_fallthru
      _
    // Predicated region
    $region42: #{tpu_custom_call.1} parent=1 // pred_check
      _
    $region43: #{tpu_custom_call.1} parent=1 // pred_check_branch
      %198 = sbr.rel (0) target = $region45
    $region44: #{tpu_custom_call.1} parent=1 // pred_region
      %200 = vsyncadd [#allocation8], 0
      %s202 = sshll.u32 [#allocation12], 4
      %s203 = int_to_ptr.vmem [resolvable:$true] %s202
      %s204 = sshll.u32 %s6, 4
      %s205 = int_to_ptr.hbm [resolvable:$true] %s204
      %207 = dma.vmem_to_hbm [thread:$0]  %s203, 128, %s205, [#allocation8]
    $region45: #{tpu_custom_call.1} parent=1 // pred_fallthru
      _
    // Predicated region
    $region46: #{tpu_custom_call.1} parent=1 // pred_check
      _
    $region47: #{tpu_custom_call.1} parent=1 // pred_check_branch
      %209 = sbr.rel (0) target = $region49
    $region48: #{tpu_custom_call.1} parent=1 // pred_region
      %211 = vsyncadd [#allocation14], 0
      %s213 = sshll.u32 [#allocation13], 4
      %s214 = int_to_ptr.vmem [resolvable:$true] %s213
      %s215 = sshll.u32 %s7, 4
      %s216 = int_to_ptr.hbm [resolvable:$true] %s215
      %218 = dma.vmem_to_hbm [thread:$0]  %s214, 128, %s216, [#allocation14]
    $region49: #{tpu_custom_call.1} parent=1 // pred_fallthru
      _
    // Predicated region
    $region50: #{tpu_custom_call.1} parent=1 // pred_check
      _
    $region51: #{tpu_custom_call.1} parent=1 // pred_check_branch
      %220 = sbr.rel (0) target = $region53
    $region52: #{tpu_custom_call.1} parent=1 // pred_region
      %222 = dma.done [#allocation8], 128
    $region53: #{tpu_custom_call.1} parent=1 // pred_fallthru
      _
    // Predicated region
    $region54: #{tpu_custom_call.1} parent=1 // pred_check
      _
    $region55: #{tpu_custom_call.1} parent=1 // pred_check_branch
      %224 = sbr.rel (0) target = $region57
    $region56: #{tpu_custom_call.1} parent=1 // pred_region
      %226 = dma.done [#allocation14], 128
    $region57: #{tpu_custom_call.1} parent=1 // pred_fallthru
      _
    %227 = vsyncpa [#allocation7], 1
    %228 = vsyncpa [#allocation10], 1
    %229 = vsyncpa [#allocation8], 1
    %230 = vsyncpa [#allocation14], 1

</llo_original>
